<compile_context>
chip_gen: v5e
topology: v5e:2x2
jax: 0.10.0
libtpu: 0.0.40
codegen_flags: <defaults>
</compile_context>

<pallas_src>
import functools

import jax
import jax.numpy as jnp
from jax.experimental import pallas as pl
from jax.experimental.pallas import tpu as pltpu


def _cw_loss_kernel(logits_ref, targets_ref, partial_ref, *,
                    margin, total_b, block_rows, needs_mask):
    logits = logits_ref[...].astype(jnp.float32)              # [TB, C] f32 (upcast in-kernel)
    tgt = targets_ref[...]                                      # [TB, 1] i32
    tb, c = logits.shape

    # (class_id == target) mask via 2-D iota compare (TPU requires >=2D iota).
    class_ids = jax.lax.broadcasted_iota(jnp.int32, (tb, c), 1)
    is_target = class_ids == tgt                                # [TB, C] bool

    # self_loss  = sum(onehot * logits)                 -> select(0)-then-sum
    # other_loss = max((1-onehot)*logits - 1000*onehot) -> select(-1000)-then-max
    self_loss = jnp.sum(jnp.where(is_target, logits, 0.0),
                        axis=1, keepdims=True)                  # [TB, 1]
    other_loss = jnp.max(jnp.where(is_target, jnp.float32(-1000.0), logits),
                         axis=1, keepdims=True)                 # [TB, 1]

    per_sample = jnp.maximum(self_loss - other_loss + jnp.float32(margin), 0.0)

    if needs_mask:
        # Mask rows past the true batch size (ragged last tile / wrapper padding).
        row_ids = (pl.program_id(0) * block_rows
                   + jax.lax.broadcasted_iota(jnp.int32, (tb, 1), 0))
        per_sample = jnp.where(row_ids < total_b, per_sample, 0.0)

    # Per-block partial sum -> row 0 of this block's (8, 1) output tile.
    partial = jnp.sum(per_sample)                               # scalar f32
    out_rows = jax.lax.broadcasted_iota(jnp.int32, (8, 1), 0)
    partial_ref[...] = jnp.where(out_rows == 0, partial, jnp.float32(0.0))


def cw_loss(logits, targets, *, margin=50.0, reduce=True, block_rows=None):
    """logits: [B, C] (any float dtype), targets: [B] int -> scalar float32."""
    B, C = logits.shape
    targets2d = jnp.reshape(targets, (B, 1)).astype(jnp.int32)

    itemsize = jnp.dtype(logits.dtype).itemsize
    if block_rows is None:
        # Aim for ~4 MiB per logits buffer (double-buffered by Pallas), multiple of 8.
        tb = max(8, (4 * 1024 * 1024) // max(1, C * itemsize))
        tb = min(1024, tb)
        tb = max(8, (tb // 8) * 8)
        tb = min(tb, ((B + 7) // 8) * 8)        # never bigger than (rounded-up) batch
    else:
        tb = max(8, (int(block_rows) // 8) * 8)

    # Pad the batch to a multiple of the tile; padded rows are masked in-kernel.
    b_pad = ((B + tb - 1) // tb) * tb
    needs_mask = b_pad != B
    if needs_mask:
        logits = jnp.pad(logits, ((0, b_pad - B), (0, 0)))
        targets2d = jnp.pad(targets2d, ((0, b_pad - B), (0, 0)))

    num_blocks = b_pad // tb
    grid = (num_blocks,)

    # Explicit VMEM budget: 2x (logits tile + targets tile + partial tile) + headroom.
    lane = 128
    c_pad = ((C + lane - 1) // lane) * lane
    need = 2 * tb * (c_pad * itemsize + lane * 4) + (2 << 20)
    vmem_limit = int(min(max(need, 8 << 20), 32 << 20))

    kernel = functools.partial(
        _cw_loss_kernel,
        margin=float(margin),
        total_b=int(B),
        block_rows=int(tb),
        needs_mask=bool(needs_mask),
    )

    partials = pl.pallas_call(
        kernel,
        out_shape=jax.ShapeDtypeStruct((8 * num_blocks, 1), jnp.float32),
        grid_spec=pltpu.PrefetchScalarGridSpec(
            num_scalar_prefetch=0,
            grid=grid,
            in_specs=[
                pl.BlockSpec((tb, C), lambda i: (i, 0)),   # logits tile (native dtype)
                pl.BlockSpec((tb, 1), lambda i: (i, 0)),   # targets tile
            ],
            out_specs=pl.BlockSpec((8, 1), lambda i: (i, 0)),  # per-block partial sum
        ),
        compiler_params=pltpu.CompilerParams(
            dimension_semantics=("parallel",),   # no carried state -> megacore-shardable
            vmem_limit_bytes=vmem_limit,
        ),
    )(logits, targets2d)

    loss = -jnp.sum(partials)                    # tiny final reduce in plain JAX
    if reduce:
        loss = loss / B
    return loss


def cw_loss_ref(logits, targets, *, margin=50.0, reduce=True):
    """Pure-JAX reference mirroring the PyTorch module."""
    B, C = logits.shape
    lg = logits.astype(jnp.float32)
    onehot = jax.nn.one_hot(targets, C, dtype=jnp.float32)
    self_loss = jnp.sum(onehot * lg, axis=1)
    other_loss = jnp.max((1.0 - onehot) * lg - onehot * 1000.0, axis=1)
    loss = -jnp.sum(jnp.maximum(self_loss - other_loss + margin, 0.0))
    if reduce:
        loss = loss / B
    return loss


if __name__ == "__main__":
    key = jax.random.PRNGKey(0)
    k1, k2, k3, k4, k5, k6 = jax.random.split(key, 6)

    # Test 1: small, single-tile (module-like shapes).
    B, NUM_CLASSES = 8, 16
    logits = jax.random.normal(k1, (B, NUM_CLASSES), dtype=jnp.float32) * 5.0
    targets = jax.random.randint(k2, (B,), 0, NUM_CLASSES, dtype=jnp.int32)

    out = cw_loss(logits, targets, margin=50.0, reduce=True)
    out = jax.block_until_ready(out)
    ref = cw_loss_ref(logits, targets, margin=50.0, reduce=True)
    assert jnp.allclose(out, ref, atol=1e-4, rtol=1e-4), (out, ref)

    # Test 2: multi-block grid + ragged last tile (B not a multiple of the tile).
    B2, C2 = 37, 16
    logits2 = jax.random.normal(k3, (B2, C2), dtype=jnp.float32) * 5.0
    targets2 = jax.random.randint(k4, (B2,), 0, C2, dtype=jnp.int32)

    out2 = cw_loss(logits2, targets2, margin=50.0, reduce=True, block_rows=16)
    out2 = jax.block_until_ready(out2)
    ref2 = cw_loss_ref(logits2, targets2, margin=50.0, reduce=True)
    assert jnp.allclose(out2, ref2, atol=1e-4, rtol=1e-4), (out2, ref2)

    # Test 3: bf16 logits (in-kernel upcast path), sum (reduce=False).
    B3, C3 = 24, 32
    logits3 = (jax.random.normal(k5, (B3, C3), dtype=jnp.float32) * 5.0).astype(jnp.bfloat16)
    targets3 = jax.random.randint(k6, (B3,), 0, C3, dtype=jnp.int32)

    out3 = cw_loss(logits3, targets3, margin=50.0, reduce=False, block_rows=8)
    out3 = jax.block_until_ready(out3)
    ref3 = cw_loss_ref(logits3, targets3, margin=50.0, reduce=False)
    assert jnp.allclose(out3, ref3, atol=1e-3, rtol=1e-3), (out3, ref3)

    print("KERNEL_OK")
</pallas_src>

<mosaic_0001>
module attributes {stable_mosaic.version = 11 : i64} {
  func.func @_cw_loss_kernel(%arg0: i32, %arg1: memref<8x16xf32, #tpu.memory_space<vmem>>, %arg2: memref<8x1xi32, #tpu.memory_space<vmem>>, %arg3: memref<8x1xf32, #tpu.memory_space<vmem>>) attributes {dimension_semantics = [#tpu.dimension_semantics<parallel>], iteration_bounds = array<i64: 1>, scalar_prefetch = 0 : i64, scratch_operands = 0 : i64, tpu.core_type = #tpu.core_type<tc>, window_params = [{transform_indices = @transform_0, window_bounds = array<i64: 8, 16>}, {transform_indices = @transform_1, window_bounds = array<i64: 8, 1>}, {transform_indices = @transform_2, window_bounds = array<i64: 8, 1>}]} {
    %c0 = arith.constant 0 : index
    %c0_0 = arith.constant 0 : index
    %0 = vector.load %arg1[%c0, %c0_0] : memref<8x16xf32, #tpu.memory_space<vmem>>, vector<8x16xf32>
    %c0_1 = arith.constant 0 : index
    %c0_2 = arith.constant 0 : index
    %1 = vector.load %arg2[%c0_1, %c0_2] : memref<8x1xi32, #tpu.memory_space<vmem>>, vector<8x1xi32>
    %2 = tpu.iota {dimensions = array<i32: 1>} : vector<8x16xi32>
    %3 = vector.broadcast %1 : vector<8x1xi32> to vector<8x16xi32>
    %4 = arith.cmpi eq, %2, %3 : vector<8x16xi32>
    %cst = arith.constant 0.000000e+00 : f32
    %5 = vector.broadcast %cst : f32 to vector<8x16xf32>
    %6 = arith.select %4, %0, %5 : vector<8x16xi1>, vector<8x16xf32>
    %cst_3 = arith.constant dense<0.000000e+00> : vector<8xf32>
    %7 = vector.multi_reduction <add>, %6, %cst_3 [1] : vector<8x16xf32> to vector<8xf32>
    %8 = vector.shape_cast %7 : vector<8xf32> to vector<8x1xf32>
    %cst_4 = arith.constant -1.000000e+03 : f32
    %9 = vector.broadcast %cst_4 : f32 to vector<8x16xf32>
    %10 = arith.select %4, %9, %0 : vector<8x16xi1>, vector<8x16xf32>
    %cst_5 = arith.constant dense<0xFF800000> : vector<8xf32>
    %11 = vector.multi_reduction <maximumf>, %10, %cst_5 [1] : vector<8x16xf32> to vector<8xf32>
    %12 = vector.shape_cast %11 : vector<8xf32> to vector<8x1xf32>
    %13 = arith.subf %8, %12 : vector<8x1xf32>
    %cst_6 = arith.constant 5.000000e+01 : f32
    %14 = vector.broadcast %cst_6 : f32 to vector<8x1xf32>
    %15 = arith.addf %13, %14 : vector<8x1xf32>
    %cst_7 = arith.constant 0.000000e+00 : f32
    %16 = vector.broadcast %cst_7 : f32 to vector<8x1xf32>
    %17 = arith.maximumf %15, %16 : vector<8x1xf32>
    %18 = vector.shape_cast %17 : vector<8x1xf32> to vector<1x8x1xf32>
    %cst_8 = arith.constant dense<0.000000e+00> : vector<1xf32>
    %19 = vector.multi_reduction <add>, %18, %cst_8 [1, 2] : vector<1x8x1xf32> to vector<1xf32>
    %20 = vector.shape_cast %19 : vector<1xf32> to vector<1x1x1xf32>
    %21 = vector.extract %20[0, 0, 0] : f32 from vector<1x1x1xf32>
    %22 = tpu.iota {dimensions = array<i32: 0>} : vector<8x1xi32>
    %c0_i32 = arith.constant 0 : i32
    %23 = vector.broadcast %c0_i32 : i32 to vector<8x1xi32>
    %24 = arith.cmpi eq, %22, %23 : vector<8x1xi32>
    %cst_9 = arith.constant 0.000000e+00 : f32
    %25 = vector.broadcast %21 : f32 to vector<8x1xf32>
    %26 = vector.broadcast %cst_9 : f32 to vector<8x1xf32>
    %27 = arith.select %24, %25, %26 : vector<8x1xi1>, vector<8x1xf32>
    %c0_10 = arith.constant 0 : index
    %c0_11 = arith.constant 0 : index
    %28 = vector.load %arg3[%c0_10, %c0_11] : memref<8x1xf32, #tpu.memory_space<vmem>>, vector<8x1xf32>
    tpu.vector_store %arg3[%c0_10, %c0_11], %27 {strides = array<i32>} : memref<8x1xf32, #tpu.memory_space<vmem>>, vector<8x1xf32>,
    return
  }
  func.func @transform_0(%arg0: i32) -> (i32, i32) {
    %c0_i32 = arith.constant 0 : i32
    %c0_i32_0 = arith.constant 0 : i32
    return %arg0, %c0_i32 : i32, i32
  }
  func.func @transform_1(%arg0: i32) -> (i32, i32) {
    %c0_i32 = arith.constant 0 : i32
    %c0_i32_0 = arith.constant 0 : i32
    return %arg0, %c0_i32 : i32, i32
  }
  func.func @transform_2(%arg0: i32) -> (i32, i32) {
    %c0_i32 = arith.constant 0 : i32
    %c0_i32_0 = arith.constant 0 : i32
    return %arg0, %c0_i32 : i32, i32
  }
}

</mosaic_0001>

<llo_original>
// kernel: tpu_custom_call.1
$region0: #{tpu_custom_call.1}
  #allocation0 [shape = 'u32[]', space=smem, size = 0x4, offset = 0x4, fixed_abs, tag = 'smem constant byte address 0x4 - core index']
  #allocation1 [shape = 'u32[72,128]{1,0:T(1,128)}', space=vmem, size = 0x9000, scoped, tag = 'internal scratch']
  %s0 = inlined_call_operand.vmem [shape: f32[8,16], index: 0, kind: input, shape index: {}]
  %s1 = inlined_call_operand.vmem [shape: s32[8,1], index: 1, kind: input, shape index: {}]
  %s2 = inlined_call_operand.vmem [shape: f32[8,1], index: 2, kind: output, shape index: {}]
  %s3 = sld [smem:[#allocation0]]
  $region18: #{tpu_custom_call.1} parent=0
    _
  %s5 = ssub.s32 1, %s3
  %s6 = scalar_select 0, %s5, %s3
  // Predicated region
  $region2: #{tpu_custom_call.1} parent=0 // pred_check
    _
  $region3: #{tpu_custom_call.1} parent=0 // pred_check_branch
    %8 = sbr.rel (0) target = $region5
  $region4: #{tpu_custom_call.1} parent=0 // pred_region
    _
  $region5: #{tpu_custom_call.1} parent=0 // pred_fallthru
    _
  // Predicated region
  $region6: #{tpu_custom_call.1} parent=0 // pred_check
    _
  $region7: #{tpu_custom_call.1} parent=0 // pred_check_branch
    %10 = sbr.rel (0) target = $region9
  $region8: #{tpu_custom_call.1} parent=0 // pred_region
    _
  $region9: #{tpu_custom_call.1} parent=0 // pred_fallthru
    _
  %v11 = vld [vmem:[%s0] sm:$0xff]
  %v12 = vld [vmem:[%s1] sm:$0xff]
  %v13 = vlaneseq
  %v14 = vand.u32 %v13, 127
  %15 = vset.pattern.permute.xlu0 0
  %16 = vperm.xlu0 %15, %v12
  %v17 = vpop.permute.xlu0 %16
  %vm18 = vcmp.eq.s32.totalorder %v14, %v17
  %v19 = vsel %vm18, %v11, 0.0
  %vm20 = vcmask 130048
  %v21 = vsel %vm20, %v19, 0.0
  %22 = vadd.xlane.f32.xlu0 %v21
  %v23 = vpop.xlane.xlu0 %22
  %v24 = vsel %vm18, -1000.0, %v11
  %v25 = vsel %vm20, %v24, -inf
  %26 = vmax.xlane.f32.xlu0 %v25
  %v27 = vpop.xlane.xlu0 %26
  %v28 = vsub.f32 %v23, %v27
  %v29 = vadd.f32 %v28, 50.0
  %v30 = vmax.f32 %v29, 0.0
  %vm31 = vcmask 7168
  %v32 = vsel %vm31, %v30, 0.0
  %33 = vadd.xlane.f32.xlu0 %v32
  %v34 = vpop.xlane.xlu0 %33
  %v35 = vrot.slane %v34, 4
  %v36 = vadd.f32 %v34, %v35
  %v37 = vrot.slane %v36, 2
  %v38 = vadd.f32 %v36, %v37
  %v39 = vrot.slane %v38, 1
  %v40 = vadd.f32 %v38, %v39
  %s41 = vtos %v40
  %v42 = vlaneseq
  %v43 = vshrl.u32 %v42, 7
  %vm44 = vcmp.eq.s32.totalorder %v43, 0
  %v45 = vstv %s41
  %v46 = vsel %vm44, %v45, 0.0
  %47 = vst.msk [vmem:[%s2] sm:$0xff] %vm31, %v46
  // Predicated region
  $region10: #{tpu_custom_call.1} parent=0 // pred_check
    _
  $region11: #{tpu_custom_call.1} parent=0 // pred_check_branch
    %49 = sbr.rel (0) target = $region13
  $region12: #{tpu_custom_call.1} parent=0 // pred_region
    _
  $region13: #{tpu_custom_call.1} parent=0 // pred_fallthru
    _
  // Predicated region
  $region14: #{tpu_custom_call.1} parent=0 // pred_check
    _
  $region15: #{tpu_custom_call.1} parent=0 // pred_check_branch
    %51 = sbr.rel (0) target = $region17
  $region16: #{tpu_custom_call.1} parent=0 // pred_region
    _
  $region17: #{tpu_custom_call.1} parent=0 // pred_fallthru
    _

</llo_original>
